<compile_context>
chip_gen: v7x
topology: tpu7x:2x2x1
jax: 0.10.0
libtpu: 0.0.40
codegen_flags: <defaults>
</compile_context>

<pallas_src>
import math

import jax
import jax.numpy as jnp
from jax import lax
from jax.experimental import pallas as pl
from jax.experimental.pallas import tpu as pltpu


def _soft_attention_kernel(enc_ref, hv_ref, w1t_ref, w2_ref, b1_ref, out_ref):
    """Fused SoftAttention for a tile of TB batch elements."""
    tb = enc_ref.shape[0]

    # Projections for the whole batch tile: two dense (2*TB, H) @ (H, H) MXU matmuls.
    #   de = linear_1(h)           (bias applied)
    #   g  = de @ W2               (the only part of linear_2 that survives softmax)
    de = jnp.dot(hv_ref[...], w1t_ref[...],
                 preferred_element_type=jnp.float32) + b1_ref[...]          # (2*TB, H)
    g = jnp.dot(de, w2_ref[...], preferred_element_type=jnp.float32)        # (2*TB, H)

    for i in range(tb):  # static unroll over the batch tile (tiny per-batch work)
        enc_i = enc_ref[i]                                                   # (S, H)
        g_i = g[2 * i:2 * i + 2, :]                                          # (2, H)

        # score.transpose(2, 1) for batch element i -> (2, S); softmax axis = lanes.
        st = lax.dot_general(g_i, enc_i, (((1,), (1,)), ((), ())),
                             preferred_element_type=jnp.float32)
        st = st - jnp.max(st, axis=-1, keepdims=True)
        p = jnp.exp(st)
        w = p / jnp.sum(p, axis=-1, keepdims=True)                           # (2, S)

        # context = weight @ encoder_outputs -> (2, H), lane-dense output.
        out_ref[i] = jnp.dot(w, enc_i,
                             preferred_element_type=jnp.float32).astype(out_ref.dtype)


def _pick_batch_tile(batch, seq, hidden, itemsize=4, budget_bytes=8 << 20, max_tile=32):
    """Largest batch tile that (a) divides B, (b) keeps the encoder tile within a VMEM
    budget, and (c) yields a legal (2*TB, H) hidden block (2*TB % 8 == 0 unless full)."""
    per_batch = seq * hidden * itemsize
    if batch <= max_tile and batch * per_batch <= budget_bytes:
        return batch
    for tb in range(min(batch, max_tile), 0, -1):
        if batch % tb != 0 or tb * per_batch > budget_bytes:
            continue
        if (2 * tb) % 8 == 0:
            return tb
    return batch  # fall back to a single step (raise the VMEM limit for pathological shapes)


def soft_attention_pallas(encoder_outputs, decoder_hidden, w1, b1, w2, b2):
    """JAX/Pallas replica of SoftAttention.forward (encoder_mask=None)."""
    dec_h, dec_c = decoder_hidden
    B, S, H = encoder_outputs.shape

    # torch: decoder_hidden[0].view(-1, 2, H); flattened to (2*B, H) so rows 2b, 2b+1
    # belong to batch element b and the tile projection is a single dense 2-D matmul.
    hv_flat = dec_h.reshape(-1, H)                                          # (2*B, H)

    w1t = jnp.transpose(w1)          # pre-transpose outside the kernel (no in-kernel .T)
    b1r = b1.reshape(1, H)
    # b2 is intentionally unused: its score contribution is constant along the softmax
    # axis and cancels exactly by softmax shift-invariance.
    del b2

    TB = _pick_batch_tile(B, S, H, encoder_outputs.dtype.itemsize)
    grid = (B // TB,)

    out = pl.pallas_call(
        _soft_attention_kernel,
        grid=grid,
        in_specs=[
            pl.BlockSpec((TB, S, H), lambda b: (b, 0, 0)),   # encoder_outputs tile
            pl.BlockSpec((2 * TB, H), lambda b: (b, 0)),     # flattened decoder hidden tile
            pl.BlockSpec((H, H), lambda b: (0, 0)),          # W1^T (resident across grid)
            pl.BlockSpec((H, H), lambda b: (0, 0)),          # W2   (resident across grid)
            pl.BlockSpec((1, H), lambda b: (0, 0)),          # b1
        ],
        out_specs=pl.BlockSpec((TB, 2, H), lambda b: (b, 0, 0)),
        out_shape=jax.ShapeDtypeStruct((B, 2, H), jnp.float32),
        compiler_params=pltpu.CompilerParams(dimension_semantics=("parallel",)),
    )(encoder_outputs, hv_flat, w1t, w2, b1r)

    # torch: h.transpose(1, 0) -> (2, B, H); cell state passed through untouched.
    return jnp.transpose(out, (1, 0, 2)), dec_c


def soft_attention_reference(encoder_outputs, decoder_hidden, w1, b1, w2, b2):
    """Pure-JAX replica of the PyTorch forward (straightforward math, for checking)."""
    dec_h, dec_c = decoder_hidden
    B, S, H = encoder_outputs.shape
    hv = dec_h.reshape(-1, 2, H)                                     # (B, 2, H)
    de = hv @ w1.T + b1                                              # (B, 2, H)
    en = encoder_outputs @ w2.T + b2                                 # (B, S, H)
    score = jnp.einsum('bsh,bth->bst', en, de)                       # (B, S, 2)
    weight = jax.nn.softmax(jnp.swapaxes(score, 2, 1), axis=-1)      # (B, 2, S)
    h = jnp.einsum('bts,bsh->bth', weight, encoder_outputs)          # (B, 2, H)
    return jnp.transpose(h, (1, 0, 2)), dec_c


if __name__ == "__main__":
    # Small shapes consistent with the module: hidden_size=128 (module default),
    # short sequence and small batch for the test.
    B, S, H = 2, 16, 128

    key = jax.random.PRNGKey(0)
    kenc, kh, kc, kw1, kb1, kw2, kb2 = jax.random.split(key, 7)
    bound = 1.0 / math.sqrt(H)   # torch nn.Linear default init range

    encoder_outputs = jax.random.normal(kenc, (B, S, H), dtype=jnp.float32)
    dec_h = jax.random.normal(kh, (2, B, H), dtype=jnp.float32)
    dec_c = jax.random.normal(kc, (2, B, H), dtype=jnp.float32)
    w1 = jax.random.uniform(kw1, (H, H), jnp.float32, -bound, bound)
    b1 = jax.random.uniform(kb1, (H,), jnp.float32, -bound, bound)
    w2 = jax.random.uniform(kw2, (H, H), jnp.float32, -bound, bound)
    b2 = jax.random.uniform(kb2, (H,), jnp.float32, -bound, bound)

    h_att, c_out = soft_attention_pallas(encoder_outputs, (dec_h, dec_c), w1, b1, w2, b2)
    h_att = jax.block_until_ready(h_att)

    h_ref, c_ref = soft_attention_reference(encoder_outputs, (dec_h, dec_c), w1, b1, w2, b2)

    assert h_att.shape == (2, B, H)
    assert jnp.allclose(h_att, h_ref, atol=1e-4, rtol=1e-4), "attention output mismatch vs reference"
    assert jnp.array_equal(c_out, c_ref), "cell state must be passed through unchanged"

    print("KERNEL_OK")
</pallas_src>

<mosaic_0001>
module attributes {stable_mosaic.version = 11 : i64} {
  func.func @_soft_attention_kernel(%arg0: i32, %arg1: memref<2x16x128xf32, #tpu.memory_space<vmem>>, %arg2: memref<4x128xf32, #tpu.memory_space<vmem>>, %arg3: memref<128x128xf32, #tpu.memory_space<vmem>>, %arg4: memref<128x128xf32, #tpu.memory_space<vmem>>, %arg5: memref<1x128xf32, #tpu.memory_space<vmem>>, %arg6: memref<2x2x128xf32, #tpu.memory_space<vmem>>) attributes {dimension_semantics = [#tpu.dimension_semantics<parallel>], iteration_bounds = array<i64: 1>, scalar_prefetch = 0 : i64, scratch_operands = 0 : i64, tpu.core_type = #tpu.core_type<tc>, window_params = [{transform_indices = @transform_0, window_bounds = array<i64: 2, 16, 128>}, {transform_indices = @transform_1, window_bounds = array<i64: 4, 128>}, {pipeline_mode = #tpu.pipeline_mode<synchronous>, transform_indices = @transform_2, window_bounds = array<i64: 128, 128>}, {pipeline_mode = #tpu.pipeline_mode<synchronous>, transform_indices = @transform_3, window_bounds = array<i64: 128, 128>}, {pipeline_mode = #tpu.pipeline_mode<synchronous>, transform_indices = @transform_4, window_bounds = array<i64: 1, 128>}, {transform_indices = @transform_5, window_bounds = array<i64: 2, 2, 128>}]} {
    %c0 = arith.constant 0 : index
    %c0_0 = arith.constant 0 : index
    %0 = vector.load %arg2[%c0, %c0_0] : memref<4x128xf32, #tpu.memory_space<vmem>>, vector<4x128xf32>
    %c0_1 = arith.constant 0 : index
    %c0_2 = arith.constant 0 : index
    %1 = vector.load %arg3[%c0_1, %c0_2] : memref<128x128xf32, #tpu.memory_space<vmem>>, vector<128x128xf32>
    %cst = arith.constant dense<0.000000e+00> : vector<4x128xf32>
    %2 = tpu.matmul %0, %1, %cst {dimension_numbers = #tpu.dot_dimension_numbers<[1], [0], [0], [1], [0, 0, 1, 1], [], []>} : vector<4x128xf32>, vector<128x128xf32>, vector<4x128xf32> -> vector<4x128xf32>
    %c0_3 = arith.constant 0 : index
    %c0_4 = arith.constant 0 : index
    %3 = vector.load %arg5[%c0_3, %c0_4] : memref<1x128xf32, #tpu.memory_space<vmem>>, vector<1x128xf32>
    %4 = vector.broadcast %3 : vector<1x128xf32> to vector<4x128xf32>
    %5 = arith.addf %2, %4 : vector<4x128xf32>
    %c0_5 = arith.constant 0 : index
    %c0_6 = arith.constant 0 : index
    %6 = vector.load %arg4[%c0_5, %c0_6] : memref<128x128xf32, #tpu.memory_space<vmem>>, vector<128x128xf32>
    %cst_7 = arith.constant dense<0.000000e+00> : vector<4x128xf32>
    %7 = tpu.matmul %5, %6, %cst_7 {dimension_numbers = #tpu.dot_dimension_numbers<[1], [0], [0], [1], [0, 0, 1, 1], [], []>} : vector<4x128xf32>, vector<128x128xf32>, vector<4x128xf32> -> vector<4x128xf32>
    %c0_8 = arith.constant 0 : index
    %c0_9 = arith.constant 0 : index
    %c0_10 = arith.constant 0 : index
    %8 = vector.load %arg1[%c0_8, %c0_9, %c0_10] : memref<2x16x128xf32, #tpu.memory_space<vmem>>, vector<1x16x128xf32>
    %9 = vector.shape_cast %8 : vector<1x16x128xf32> to vector<16x128xf32>
    %10 = vector.extract_strided_slice %7 {offsets = [0, 0], sizes = [2, 128], strides = [1, 1]} : vector<4x128xf32> to vector<2x128xf32>
    %cst_11 = arith.constant dense<0.000000e+00> : vector<2x16xf32>
    %11 = tpu.matmul %10, %9, %cst_11 {dimension_numbers = #tpu.dot_dimension_numbers<[1], [1], [0], [0], [0, 0, 1, 0], [], []>} : vector<2x128xf32>, vector<16x128xf32>, vector<2x16xf32> -> vector<2x16xf32>
    %cst_12 = arith.constant dense<0xFF800000> : vector<2xf32>
    %12 = vector.multi_reduction <maximumf>, %11, %cst_12 [1] : vector<2x16xf32> to vector<2xf32>
    %13 = vector.shape_cast %12 : vector<2xf32> to vector<2x1xf32>
    %14 = vector.broadcast %13 : vector<2x1xf32> to vector<2x16xf32>
    %15 = arith.subf %11, %14 : vector<2x16xf32>
    %16 = math.exp %15 : vector<2x16xf32>
    %cst_13 = arith.constant dense<0.000000e+00> : vector<2xf32>
    %17 = vector.multi_reduction <add>, %16, %cst_13 [1] : vector<2x16xf32> to vector<2xf32>
    %18 = vector.shape_cast %17 : vector<2xf32> to vector<2x1xf32>
    %19 = vector.broadcast %18 : vector<2x1xf32> to vector<2x16xf32>
    %20 = arith.divf %16, %19 : vector<2x16xf32>
    %cst_14 = arith.constant dense<0.000000e+00> : vector<2x128xf32>
    %21 = tpu.matmul %20, %9, %cst_14 {dimension_numbers = #tpu.dot_dimension_numbers<[1], [0], [0], [1], [0, 0, 1, 1], [], []>} : vector<2x16xf32>, vector<16x128xf32>, vector<2x128xf32> -> vector<2x128xf32>
    %c0_15 = arith.constant 0 : index
    %c0_16 = arith.constant 0 : index
    %c0_17 = arith.constant 0 : index
    %22 = vector.load %arg6[%c0_15, %c0_16, %c0_17] : memref<2x2x128xf32, #tpu.memory_space<vmem>>, vector<1x2x128xf32>
    %23 = vector.shape_cast %22 : vector<1x2x128xf32> to vector<2x128xf32>
    %24 = vector.shape_cast %21 : vector<2x128xf32> to vector<1x2x128xf32>
    tpu.vector_store %arg6[%c0_15, %c0_16, %c0_17], %24 {strides = array<i32>} : memref<2x2x128xf32, #tpu.memory_space<vmem>>, vector<1x2x128xf32>,
    %c1 = arith.constant 1 : index
    %c0_18 = arith.constant 0 : index
    %c0_19 = arith.constant 0 : index
    %25 = vector.load %arg1[%c1, %c0_18, %c0_19] : memref<2x16x128xf32, #tpu.memory_space<vmem>>, vector<1x16x128xf32>
    %26 = vector.shape_cast %25 : vector<1x16x128xf32> to vector<16x128xf32>
    %27 = vector.extract_strided_slice %7 {offsets = [2, 0], sizes = [2, 128], strides = [1, 1]} : vector<4x128xf32> to vector<2x128xf32>
    %cst_20 = arith.constant dense<0.000000e+00> : vector<2x16xf32>
    %28 = tpu.matmul %27, %26, %cst_20 {dimension_numbers = #tpu.dot_dimension_numbers<[1], [1], [0], [0], [0, 0, 1, 0], [], []>} : vector<2x128xf32>, vector<16x128xf32>, vector<2x16xf32> -> vector<2x16xf32>
    %cst_21 = arith.constant dense<0xFF800000> : vector<2xf32>
    %29 = vector.multi_reduction <maximumf>, %28, %cst_21 [1] : vector<2x16xf32> to vector<2xf32>
    %30 = vector.shape_cast %29 : vector<2xf32> to vector<2x1xf32>
    %31 = vector.broadcast %30 : vector<2x1xf32> to vector<2x16xf32>
    %32 = arith.subf %28, %31 : vector<2x16xf32>
    %33 = math.exp %32 : vector<2x16xf32>
    %cst_22 = arith.constant dense<0.000000e+00> : vector<2xf32>
    %34 = vector.multi_reduction <add>, %33, %cst_22 [1] : vector<2x16xf32> to vector<2xf32>
    %35 = vector.shape_cast %34 : vector<2xf32> to vector<2x1xf32>
    %36 = vector.broadcast %35 : vector<2x1xf32> to vector<2x16xf32>
    %37 = arith.divf %33, %36 : vector<2x16xf32>
    %cst_23 = arith.constant dense<0.000000e+00> : vector<2x128xf32>
    %38 = tpu.matmul %37, %26, %cst_23 {dimension_numbers = #tpu.dot_dimension_numbers<[1], [0], [0], [1], [0, 0, 1, 1], [], []>} : vector<2x16xf32>, vector<16x128xf32>, vector<2x128xf32> -> vector<2x128xf32>
    %c1_24 = arith.constant 1 : index
    %c0_25 = arith.constant 0 : index
    %c0_26 = arith.constant 0 : index
    %39 = vector.load %arg6[%c1_24, %c0_25, %c0_26] : memref<2x2x128xf32, #tpu.memory_space<vmem>>, vector<1x2x128xf32>
    %40 = vector.shape_cast %39 : vector<1x2x128xf32> to vector<2x128xf32>
    %41 = vector.shape_cast %38 : vector<2x128xf32> to vector<1x2x128xf32>
    tpu.vector_store %arg6[%c1_24, %c0_25, %c0_26], %41 {strides = array<i32>} : memref<2x2x128xf32, #tpu.memory_space<vmem>>, vector<1x2x128xf32>,
    return
  }
  func.func @transform_0(%arg0: i32) -> (i32, i32, i32) {
    %c0_i32 = arith.constant 0 : i32
    %c0_i32_0 = arith.constant 0 : i32
    %c0_i32_1 = arith.constant 0 : i32
    return %arg0, %c0_i32, %c0_i32_0 : i32, i32, i32
  }
  func.func @transform_1(%arg0: i32) -> (i32, i32) {
    %c0_i32 = arith.constant 0 : i32
    %c0_i32_0 = arith.constant 0 : i32
    return %arg0, %c0_i32 : i32, i32
  }
  func.func @transform_2(%arg0: i32) -> (i32, i32) {
    %c0_i32 = arith.constant 0 : i32
    %c0_i32_0 = arith.constant 0 : i32
    %c0_i32_1 = arith.constant 0 : i32
    return %c0_i32, %c0_i32_0 : i32, i32
  }
  func.func @transform_3(%arg0: i32) -> (i32, i32) {
    %c0_i32 = arith.constant 0 : i32
    %c0_i32_0 = arith.constant 0 : i32
    %c0_i32_1 = arith.constant 0 : i32
    return %c0_i32, %c0_i32_0 : i32, i32
  }
  func.func @transform_4(%arg0: i32) -> (i32, i32) {
    %c0_i32 = arith.constant 0 : i32
    %c0_i32_0 = arith.constant 0 : i32
    %c0_i32_1 = arith.constant 0 : i32
    return %c0_i32, %c0_i32_0 : i32, i32
  }
  func.func @transform_5(%arg0: i32) -> (i32, i32, i32) {
    %c0_i32 = arith.constant 0 : i32
    %c0_i32_0 = arith.constant 0 : i32
    %c0_i32_1 = arith.constant 0 : i32
    return %arg0, %c0_i32, %c0_i32_0 : i32, i32, i32
  }
}

</mosaic_0001>

<llo_original>
// kernel: tpu_custom_call.1
$region0: #{tpu_custom_call.1}
  #allocation0 [shape = 'u32[]', space=smem, size = 0x4, offset = 0x4, fixed_abs, tag = 'smem constant byte address 0x4 - core index']
  #allocation1 [shape = 'u32[144,128]{1,0:T(1,128)}', space=vmem, size = 0x12000, scoped, tag = 'internal scratch']
  %s0 = inlined_call_operand.hbm [shape: f32[2,16,128], index: 0, kind: input, shape index: {}]
  %s1 = inlined_call_operand.hbm [shape: f32[4,128], index: 1, kind: input, shape index: {}]
  %s2 = inlined_call_operand.hbm [shape: f32[128,128], index: 2, kind: input, shape index: {}]
  %s3 = inlined_call_operand.hbm [shape: f32[128,128], index: 3, kind: input, shape index: {}]
  %s4 = inlined_call_operand.vmem [shape: f32[1,128], index: 4, kind: input, shape index: {}]
  %s5 = inlined_call_operand.hbm [shape: f32[2,2,128], index: 5, kind: output, shape index: {}]
  %s6 = sld [smem:[#allocation0]]
  $region46: #{tpu_custom_call.1} parent=0
    _
  %s8 = ssub.s32 1, %s6
  %s9 = scalar_select 0, %s8, %s6
  $region1: #{tpu_custom_call.1} parent=0
    #allocation2 [shape = 'u8[16384]{0}', space=vmem, size = 0x4000, scoped, tag = 'input window, operand 0, single buffered']
    #allocation3 [shape = 's32[1]{0}', space=sflag, size = 0x4, scoped, tag = 'scoped memory for tpu_custom_call.1']
    #allocation4 [shape = 's32[1]{0}', space=sflag, size = 0x4, scoped, tag = 'scoped memory for tpu_custom_call.1']
    #allocation5 [shape = 'u8[2048]{0}', space=vmem, size = 0x800, scoped, tag = 'input window, operand 1, single buffered']
    #allocation6 [shape = 's32[1]{0}', space=sflag, size = 0x4, scoped, tag = 'scoped memory for tpu_custom_call.1']
    #allocation7 [shape = 'u8[65536]{0}', space=vmem, size = 0x10000, scoped, tag = 'input window, operand 2, single buffered']
    #allocation8 [shape = 'u8[65536]{0}', space=vmem, size = 0x10000, scoped, tag = 'input window, operand 3, single buffered']
    #allocation9 [shape = 's32[1]{0}', space=sflag, size = 0x4, scoped, tag = 'scoped memory for tpu_custom_call.1']
    #allocation10 [shape = 'u8[2048]{0}', space=vmem, size = 0x800, scoped, tag = 'output window, operand 0, single buffered']
    %10 = vsyncpa [#allocation3], 0
    %11 = vsyncpa [#allocation6], 0
    %12 = vsyncpa [#allocation9], 0
    %13 = vsyncpa [#allocation4], 0
    // Predicated region
    $region2: #{tpu_custom_call.1} parent=1 // pred_check
      _
    $region3: #{tpu_custom_call.1} parent=1 // pred_check_branch
      %15 = sbr.rel (0) target = $region5
    $region4: #{tpu_custom_call.1} parent=1 // pred_region
      %s17 = ssub.s32 512, 512
      %18 = vsyncadd [#allocation3], %s17
      %s19 = sshll.u32 [#allocation2], 4
      %s20 = int_to_ptr.vmem [resolvable:$true] %s19
      %25 = dma.hbm_to_vmem [thread:$0]  %s0, 512, %s20, [#allocation3], 128, 128, 8
    $region5: #{tpu_custom_call.1} parent=1 // pred_fallthru
      _
    // Predicated region
    $region6: #{tpu_custom_call.1} parent=1 // pred_check
      _
    $region7: #{tpu_custom_call.1} parent=1 // pred_check_branch
      %27 = sbr.rel (0) target = $region9
    $region8: #{tpu_custom_call.1} parent=1 // pred_region
      %s29 = ssub.s32 64, 64
      %30 = vsyncadd [#allocation6], %s29
      %s32 = sshll.u32 [#allocation5], 4
      %s33 = int_to_ptr.vmem [resolvable:$true] %s32
      %35 = dma.hbm_to_vmem [thread:$0]  %s1, 64, %s33, [#allocation6]
    $region9: #{tpu_custom_call.1} parent=1 // pred_fallthru
      _
    // Predicated region
    $region10: #{tpu_custom_call.1} parent=1 // pred_check
      _
    $region11: #{tpu_custom_call.1} parent=1 // pred_check_branch
      %37 = sbr.rel (0) target = $region13
    $region12: #{tpu_custom_call.1} parent=1 // pred_region
      %s39 = ssub.s32 2048, 2048
      %40 = vsyncadd [#allocation6], %s39
      %s41 = sshll.u32 [#allocation7], 4
      %s42 = int_to_ptr.vmem [resolvable:$true] %s41
      %47 = dma.hbm_to_vmem [thread:$0]  %s2, 2048, %s42, [#allocation6], 128, 128, 8
    $region13: #{tpu_custom_call.1} parent=1 // pred_fallthru
      _
    // Predicated region
    $region14: #{tpu_custom_call.1} parent=1 // pred_check
      _
    $region15: #{tpu_custom_call.1} parent=1 // pred_check_branch
      %49 = sbr.rel (0) target = $region17
    $region16: #{tpu_custom_call.1} parent=1 // pred_region
      %s51 = ssub.s32 2048, 2048
      %52 = vsyncadd [#allocation9], %s51
      %s53 = sshll.u32 [#allocation8], 4
      %s54 = int_to_ptr.vmem [resolvable:$true] %s53
      %59 = dma.hbm_to_vmem [thread:$0]  %s3, 2048, %s54, [#allocation9], 128, 128, 8
    $region17: #{tpu_custom_call.1} parent=1 // pred_fallthru
      _
    // Predicated region
    $region18: #{tpu_custom_call.1} parent=1 // pred_check
      _
    $region19: #{tpu_custom_call.1} parent=1 // pred_check_branch
      %61 = sbr.rel (0) target = $region21
    $region20: #{tpu_custom_call.1} parent=1 // pred_region
      _
    $region21: #{tpu_custom_call.1} parent=1 // pred_fallthru
      _
    // Predicated region
    $region22: #{tpu_custom_call.1} parent=1 // pred_check
      _
    $region23: #{tpu_custom_call.1} parent=1 // pred_check_branch
      %63 = sbr.rel (0) target = $region25
    $region24: #{tpu_custom_call.1} parent=1 // pred_region
      %64 = dma.done [#allocation3], 512
    $region25: #{tpu_custom_call.1} parent=1 // pred_fallthru
      _
    // Predicated region
    $region26: #{tpu_custom_call.1} parent=1 // pred_check
      _
    $region27: #{tpu_custom_call.1} parent=1 // pred_check_branch
      %66 = sbr.rel (0) target = $region29
    $region28: #{tpu_custom_call.1} parent=1 // pred_region
      %67 = dma.done [#allocation6], 64
    $region29: #{tpu_custom_call.1} parent=1 // pred_fallthru
      _
    // Predicated region
    $region30: #{tpu_custom_call.1} parent=1 // pred_check
      _
    $region31: #{tpu_custom_call.1} parent=1 // pred_check_branch
      %69 = sbr.rel (0) target = $region33
    $region32: #{tpu_custom_call.1} parent=1 // pred_region
      %70 = dma.done [#allocation6], 2048
    $region33: #{tpu_custom_call.1} parent=1 // pred_fallthru
      _
    // Predicated region
    $region34: #{tpu_custom_call.1} parent=1 // pred_check
      _
    $region35: #{tpu_custom_call.1} parent=1 // pred_check_branch
      %72 = sbr.rel (0) target = $region37
    $region36: #{tpu_custom_call.1} parent=1 // pred_region
      %73 = dma.done [#allocation9], 2048
    $region37: #{tpu_custom_call.1} parent=1 // pred_fallthru
      _
    %v74 = vld [vmem:[#allocation5] sm:$0xf]
    %v75 = vld [vmem:[#allocation7] sm:$0xff]
    %v76 = vld [vmem:[#allocation7 + $0x8] sm:$0xff]
    %v77 = vld [vmem:[#allocation7 + $0x10] sm:$0xff]
    %v78 = vld [vmem:[#allocation7 + $0x18] sm:$0xff]
    %v79 = vld [vmem:[#allocation7 + $0x20] sm:$0xff]
    %v80 = vld [vmem:[#allocation7 + $0x28] sm:$0xff]
    %v81 = vld [vmem:[#allocation7 + $0x30] sm:$0xff]
    %v82 = vld [vmem:[#allocation7 + $0x38] sm:$0xff]
    %v83 = vld [vmem:[#allocation7 + $0x40] sm:$0xff]
    %v84 = vld [vmem:[#allocation7 + $0x48] sm:$0xff]
    %v85 = vld [vmem:[#allocation7 + $0x50] sm:$0xff]
    %v86 = vld [vmem:[#allocation7 + $0x58] sm:$0xff]
    %v87 = vld [vmem:[#allocation7 + $0x60] sm:$0xff]
    %v88 = vld [vmem:[#allocation7 + $0x68] sm:$0xff]
    %v89 = vld [vmem:[#allocation7 + $0x70] sm:$0xff]
    %v90 = vld [vmem:[#allocation7 + $0x78] sm:$0xff]
    %v91 = vld [vmem:[%s4] sm:$0x1]
    %v93 = vlaneseq
    %v94 = vshrl.u32 %v93, 7
    %v95 = vsub.s32 0, %v94
    %v96 = vrot.slane %v91, %v95
    %98 = vmatprep.subr.mxu0 0.0
    %99 = vmatpush1.msra.mxu0 %v75
    %100 = vmatprep.subr.mxu0 0.0
    %101 = vmatpush1.msra.mxu0 %v76
    %102 = vmatprep.subr.mxu0 0.0
    %103 = vmatpush1.msra.mxu0 %v77
    %104 = vmatprep.subr.mxu0 0.0
    %105 = vmatpush1.msra.mxu0 %v78
    %106 = vmatprep.subr.mxu0 0.0
    %107 = vmatpush1.msra.mxu0 %v79
    %108 = vmatprep.subr.mxu0 0.0
    %109 = vmatpush1.msra.mxu0 %v80
    %110 = vmatprep.subr.mxu0 0.0
    %111 = vmatpush1.msra.mxu0 %v81
    %112 = vmatprep.subr.mxu0 0.0
    %113 = vmatpush1.msra.mxu0 %v82
    %114 = vmatprep.subr.mxu0 0.0
    %115 = vmatpush1.msra.mxu0 %v83
    %116 = vmatprep.subr.mxu0 0.0
    %117 = vmatpush1.msra.mxu0 %v84
    %118 = vmatprep.subr.mxu0 0.0
    %119 = vmatpush1.msra.mxu0 %v85
    %120 = vmatprep.subr.mxu0 0.0
    %121 = vmatpush1.msra.mxu0 %v86
    %122 = vmatprep.subr.mxu0 0.0
    %123 = vmatpush1.msra.mxu0 %v87
    %124 = vmatprep.subr.mxu0 0.0
    %125 = vmatpush1.msra.mxu0 %v88
    %126 = vmatprep.subr.mxu0 0.0
    %127 = vmatpush1.msra.mxu0 %v89
    %128 = vmatprep.subr.mxu0 0.0
    %129 = vmatpush1.msra.mxu0 %v90
    %130 = vmatprep.subr.mxu0 0.0
    %131 = vmatpush1.msra.mxu0 0.0
    %132 = vmatprep.subr.mxu0 0.0
    %133 = vmatpush1.msra.mxu0 0.0
    %134 = vmatprep.subr.mxu0 0.0
    %135 = vmatpush1.msra.mxu0 0.0
    %136 = vmatprep.subr.mxu0 0.0
    %137 = vmatpush1.msra.mxu0 0.0
    %138 = vmatprep.subr.mxu0 0.0
    %139 = vmatpush1.msra.mxu0 0.0
    %140 = vmatprep.subr.mxu0 0.0
    %141 = vmatpush1.msra.mxu0 0.0
    %142 = vmatprep.subr.mxu0 0.0
    %143 = vmatpush1.msra.mxu0 0.0
    %144 = vmatprep.subr.mxu0 0.0
    %145 = vmatpush1.msra.mxu0 0.0
    %146 = vmatprep.subr.mxu0 0.0
    %147 = vmatpush1.msra.mxu0 0.0
    %148 = vmatprep.subr.mxu0 0.0
    %149 = vmatpush1.msra.mxu0 0.0
    %150 = vmatprep.subr.mxu0 0.0
    %151 = vmatpush1.msra.mxu0 0.0
    %152 = vmatprep.subr.mxu0 0.0
    %153 = vmatpush1.msra.mxu0 0.0
    %154 = vmatprep.subr.mxu0 0.0
    %155 = vmatpush1.msra.mxu0 0.0
    %156 = vmatprep.subr.mxu0 0.0
    %157 = vmatpush1.msra.mxu0 0.0
    %158 = vmatprep.subr.mxu0 0.0
    %159 = vmatpush1.msra.mxu0 0.0
    %160 = vmatprep.subr.mxu0 0.0
    %161 = vmatpush1.msra.mxu0 0.0
    %162 = vmatprep.mubr.f32.mxu0 0.0
    %163 = vmatmul.mubr.f32.gmra.mrb[0].mxu0 %v74
    %v164 = vpop.f32.mrb[0].mxu0
    %v165 = vadd.f32 %v96, %v164
    %v166 = vpop.f32.mrb[0].mxu0
    %167 = vdwg.mxu0
    %v168 = vld [vmem:[#allocation8] sm:$0xff]
    %v169 = vld [vmem:[#allocation8 + $0x8] sm:$0xff]
    %v170 = vld [vmem:[#allocation8 + $0x10] sm:$0xff]
    %v171 = vld [vmem:[#allocation8 + $0x18] sm:$0xff]
    %v172 = vld [vmem:[#allocation8 + $0x20] sm:$0xff]
    %v173 = vld [vmem:[#allocation8 + $0x28] sm:$0xff]
    %v174 = vld [vmem:[#allocation8 + $0x30] sm:$0xff]
    %v175 = vld [vmem:[#allocation8 + $0x38] sm:$0xff]
    %v176 = vld [vmem:[#allocation8 + $0x40] sm:$0xff]
    %v177 = vld [vmem:[#allocation8 + $0x48] sm:$0xff]
    %v178 = vld [vmem:[#allocation8 + $0x50] sm:$0xff]
    %v179 = vld [vmem:[#allocation8 + $0x58] sm:$0xff]
    %v180 = vld [vmem:[#allocation8 + $0x60] sm:$0xff]
    %v181 = vld [vmem:[#allocation8 + $0x68] sm:$0xff]
    %v182 = vld [vmem:[#allocation8 + $0x70] sm:$0xff]
    %v183 = vld [vmem:[#allocation8 + $0x78] sm:$0xff]
    %184 = vmatprep.subr.mxu0 0.0
    %185 = vmatpush1.msra.mxu0 %v168
    %186 = vmatprep.subr.mxu0 0.0
    %187 = vmatpush1.msra.mxu0 %v169
    %188 = vmatprep.subr.mxu0 0.0
    %189 = vmatpush1.msra.mxu0 %v170
    %190 = vmatprep.subr.mxu0 0.0
    %191 = vmatpush1.msra.mxu0 %v171
    %192 = vmatprep.subr.mxu0 0.0
    %193 = vmatpush1.msra.mxu0 %v172
    %194 = vmatprep.subr.mxu0 0.0
    %195 = vmatpush1.msra.mxu0 %v173
    %196 = vmatprep.subr.mxu0 0.0
    %197 = vmatpush1.msra.mxu0 %v174
    %198 = vmatprep.subr.mxu0 0.0
    %199 = vmatpush1.msra.mxu0 %v175
    %200 = vmatprep.subr.mxu0 0.0
    %201 = vmatpush1.msra.mxu0 %v176
    %202 = vmatprep.subr.mxu0 0.0
    %203 = vmatpush1.msra.mxu0 %v177
    %204 = vmatprep.subr.mxu0 0.0
    %205 = vmatpush1.msra.mxu0 %v178
    %206 = vmatprep.subr.mxu0 0.0
    %207 = vmatpush1.msra.mxu0 %v179
    %208 = vmatprep.subr.mxu0 0.0
    %209 = vmatpush1.msra.mxu0 %v180
    %210 = vmatprep.subr.mxu0 0.0
    %211 = vmatpush1.msra.mxu0 %v181
    %212 = vmatprep.subr.mxu0 0.0
    %213 = vmatpush1.msra.mxu0 %v182
    %214 = vmatprep.subr.mxu0 0.0
    %215 = vmatpush1.msra.mxu0 %v183
    %216 = vmatprep.subr.mxu0 0.0
    %217 = vmatpush1.msra.mxu0 0.0
    %218 = vmatprep.subr.mxu0 0.0
    %219 = vmatpush1.msra.mxu0 0.0
    %220 = vmatprep.subr.mxu0 0.0
    %221 = vmatpush1.msra.mxu0 0.0
    %222 = vmatprep.subr.mxu0 0.0
    %223 = vmatpush1.msra.mxu0 0.0
    %224 = vmatprep.subr.mxu0 0.0
    %225 = vmatpush1.msra.mxu0 0.0
    %226 = vmatprep.subr.mxu0 0.0
    %227 = vmatpush1.msra.mxu0 0.0
    %228 = vmatprep.subr.mxu0 0.0
    %229 = vmatpush1.msra.mxu0 0.0
    %230 = vmatprep.subr.mxu0 0.0
    %231 = vmatpush1.msra.mxu0 0.0
    %232 = vmatprep.subr.mxu0 0.0
    %233 = vmatpush1.msra.mxu0 0.0
    %234 = vmatprep.subr.mxu0 0.0
    %235 = vmatpush1.msra.mxu0 0.0
    %236 = vmatprep.subr.mxu0 0.0
    %237 = vmatpush1.msra.mxu0 0.0
    %238 = vmatprep.subr.mxu0 0.0
    %239 = vmatpush1.msra.mxu0 0.0
    %240 = vmatprep.subr.mxu0 0.0
    %241 = vmatpush1.msra.mxu0 0.0
    %242 = vmatprep.subr.mxu0 0.0
    %243 = vmatpush1.msra.mxu0 0.0
    %244 = vmatprep.subr.mxu0 0.0
    %245 = vmatpush1.msra.mxu0 0.0
    %246 = vmatprep.subr.mxu0 0.0
    %247 = vmatpush1.msra.mxu0 0.0
    %248 = vmatprep.mubr.f32.mxu0 0.0
    %249 = vmatmul.mubr.f32.gmra.mrb[0].mxu0 %v165
    %v250 = vpop.f32.mrb[0].mxu0
    %v251 = vadd.f32 0.0, %v250
    %v252 = vpop.f32.mrb[0].mxu0
    %253 = vdwg.mxu0
    %v254 = vld [vmem:[#allocation2] sm:$0xff]
    %v255 = vld [vmem:[#allocation2 + $0x8] sm:$0xff]
    %256 = vmatprep.subr.mxu0 0.0
    %257 = vmatpush1.xpose.msra.mxu0 %v254
    %258 = vmatprep.subr.mxu0 0.0
    %259 = vmatpush1.xpose.msra.mxu0 %v255
    %260 = vmatprep.subr.mxu0 0.0
    %261 = vmatpush1.xpose.msra.mxu0 0.0
    %262 = vmatprep.subr.mxu0 0.0
    %263 = vmatpush1.xpose.msra.mxu0 0.0
    %264 = vmatprep.subr.mxu0 0.0
    %265 = vmatpush1.xpose.msra.mxu0 0.0
    %266 = vmatprep.subr.mxu0 0.0
    %267 = vmatpush1.xpose.msra.mxu0 0.0
    %268 = vmatprep.subr.mxu0 0.0
    %269 = vmatpush1.xpose.msra.mxu0 0.0
    %270 = vmatprep.subr.mxu0 0.0
    %271 = vmatpush1.xpose.msra.mxu0 0.0
    %272 = vmatprep.subr.mxu0 0.0
    %273 = vmatpush1.xpose.msra.mxu0 0.0
    %274 = vmatprep.subr.mxu0 0.0
    %275 = vmatpush1.xpose.msra.mxu0 0.0
    %276 = vmatprep.subr.mxu0 0.0
    %277 = vmatpush1.xpose.msra.mxu0 0.0
    %278 = vmatprep.subr.mxu0 0.0
    %279 = vmatpush1.xpose.msra.mxu0 0.0
    %280 = vmatprep.subr.mxu0 0.0
    %281 = vmatpush1.xpose.msra.mxu0 0.0
    %282 = vmatprep.subr.mxu0 0.0
    %283 = vmatpush1.xpose.msra.mxu0 0.0
    %284 = vmatprep.subr.mxu0 0.0
    %285 = vmatpush1.xpose.msra.mxu0 0.0
    %286 = vmatprep.subr.mxu0 0.0
    %287 = vmatpush1.xpose.msra.mxu0 0.0
    %288 = vmatprep.subr.mxu0 0.0
    %289 = vmatpush1.xpose.msra.mxu0 0.0
    %290 = vmatprep.subr.mxu0 0.0
    %291 = vmatpush1.xpose.msra.mxu0 0.0
    %292 = vmatprep.subr.mxu0 0.0
    %293 = vmatpush1.xpose.msra.mxu0 0.0
    %294 = vmatprep.subr.mxu0 0.0
    %295 = vmatpush1.xpose.msra.mxu0 0.0
    %296 = vmatprep.subr.mxu0 0.0
    %297 = vmatpush1.xpose.msra.mxu0 0.0
    %298 = vmatprep.subr.mxu0 0.0
    %299 = vmatpush1.xpose.msra.mxu0 0.0
    %300 = vmatprep.subr.mxu0 0.0
    %301 = vmatpush1.xpose.msra.mxu0 0.0
    %302 = vmatprep.subr.mxu0 0.0
    %303 = vmatpush1.xpose.msra.mxu0 0.0
    %304 = vmatprep.subr.mxu0 0.0
    %305 = vmatpush1.xpose.msra.mxu0 0.0
    %306 = vmatprep.subr.mxu0 0.0
    %307 = vmatpush1.xpose.msra.mxu0 0.0
    %308 = vmatprep.subr.mxu0 0.0
    %309 = vmatpush1.xpose.msra.mxu0 0.0
    %310 = vmatprep.subr.mxu0 0.0
    %311 = vmatpush1.xpose.msra.mxu0 0.0
    %312 = vmatprep.subr.mxu0 0.0
    %313 = vmatpush1.xpose.msra.mxu0 0.0
    %314 = vmatprep.subr.mxu0 0.0
    %315 = vmatpush1.xpose.msra.mxu0 0.0
    %316 = vmatprep.subr.mxu0 0.0
    %317 = vmatpush1.xpose.msra.mxu0 0.0
    %318 = vmatprep.subr.mxu0 0.0
    %319 = vmatpush1.xpose.msra.mxu0 0.0
    %320 = vmatprep.mubr.f32.mxu0 0.0
    %321 = vmatmul.mubr.f32.gmra.mrb[0].mxu0 %v251
    %v322 = vpop.f32.mrb[0].mxu0
    %v323 = vadd.f32 0.0, %v322
    %v324 = vpop.f32.mrb[0].mxu0
    %325 = vdwg.mxu0
    %vm326 = vcmask 123904
    %v327 = vsel %vm326, %v323, -inf
    %328 = vmax.xlane.f32.xlu0 %v327
    %v329 = vpop.xlane.xlu0 %328
    %v330 = vsub.f32 %v323, %v329
    %v331 = vmul.f32 %v330, 1.442695
    %v332 = vpow.pop %v331
    %v333 = vsel %vm326, %v332, 0.0
    %334 = vadd.xlane.f32.xlu0 %v333
    %v335 = vpop.xlane.xlu0 %334
    %v336 = vrcp.pop %v335
    %v337 = vmul.f32 %v332, %v336
    %vm338 = vcmask 130048
    %v340 = vsel %vm338, %v337, 0
    %342 = vmatprep.subr.mxu0 0.0
    %343 = vmatpush1.msra.mxu0 %v254
    %344 = vmatprep.subr.mxu0 0.0
    %345 = vmatpush1.msra.mxu0 %v255
    %346 = vmatprep.subr.mxu0 0.0
    %347 = vmatpush1.msra.mxu0 0.0
    %348 = vmatprep.subr.mxu0 0.0
    %349 = vmatpush1.msra.mxu0 0.0
    %350 = vmatprep.subr.mxu0 0.0
    %351 = vmatpush1.msra.mxu0 0.0
    %352 = vmatprep.subr.mxu0 0.0
    %353 = vmatpush1.msra.mxu0 0.0
    %354 = vmatprep.subr.mxu0 0.0
    %355 = vmatpush1.msra.mxu0 0.0
    %356 = vmatprep.subr.mxu0 0.0
    %357 = vmatpush1.msra.mxu0 0.0
    %358 = vmatprep.subr.mxu0 0.0
    %359 = vmatpush1.msra.mxu0 0.0
    %360 = vmatprep.subr.mxu0 0.0
    %361 = vmatpush1.msra.mxu0 0.0
    %362 = vmatprep.subr.mxu0 0.0
    %363 = vmatpush1.msra.mxu0 0.0
    %364 = vmatprep.subr.mxu0 0.0
    %365 = vmatpush1.msra.mxu0 0.0
    %366 = vmatprep.subr.mxu0 0.0
    %367 = vmatpush1.msra.mxu0 0.0
    %368 = vmatprep.subr.mxu0 0.0
    %369 = vmatpush1.msra.mxu0 0.0
    %370 = vmatprep.subr.mxu0 0.0
    %371 = vmatpush1.msra.mxu0 0.0
    %372 = vmatprep.subr.mxu0 0.0
    %373 = vmatpush1.msra.mxu0 0.0
    %374 = vmatprep.subr.mxu0 0.0
    %375 = vmatpush1.msra.mxu0 0.0
    %376 = vmatprep.subr.mxu0 0.0
    %377 = vmatpush1.msra.mxu0 0.0
    %378 = vmatprep.subr.mxu0 0.0
    %379 = vmatpush1.msra.mxu0 0.0
    %380 = vmatprep.subr.mxu0 0.0
    %381 = vmatpush1.msra.mxu0 0.0
    %382 = vmatprep.subr.mxu0 0.0
    %383 = vmatpush1.msra.mxu0 0.0
    %384 = vmatprep.subr.mxu0 0.0
    %385 = vmatpush1.msra.mxu0 0.0
    %386 = vmatprep.subr.mxu0 0.0
    %387 = vmatpush1.msra.mxu0 0.0
    %388 = vmatprep.subr.mxu0 0.0
    %389 = vmatpush1.msra.mxu0 0.0
    %390 = vmatprep.subr.mxu0 0.0
    %391 = vmatpush1.msra.mxu0 0.0
    %392 = vmatprep.subr.mxu0 0.0
    %393 = vmatpush1.msra.mxu0 0.0
    %394 = vmatprep.subr.mxu0 0.0
    %395 = vmatpush1.msra.mxu0 0.0
    %396 = vmatprep.subr.mxu0 0.0
    %397 = vmatpush1.msra.mxu0 0.0
    %398 = vmatprep.subr.mxu0 0.0
    %399 = vmatpush1.msra.mxu0 0.0
    %400 = vmatprep.subr.mxu0 0.0
    %401 = vmatpush1.msra.mxu0 0.0
    %402 = vmatprep.subr.mxu0 0.0
    %403 = vmatpush1.msra.mxu0 0.0
    %404 = vmatprep.subr.mxu0 0.0
    %405 = vmatpush1.msra.mxu0 0.0
    %406 = vmatprep.mubr.f32.mxu0 0.0
    %407 = vmatmul.mubr.f32.gmra.mrb[0].mxu0 %v340
    %v408 = vpop.f32.mrb[0].mxu0
    %v409 = vadd.f32 0.0, %v408
    %v410 = vpop.f32.mrb[0].mxu0
    %411 = vdwg.mxu0
    %412 = vst [vmem:[#allocation10] sm:$0x3] %v409
    %s413 = scalar_lea.vmem [#allocation2], 16
    %v414 = vld [vmem:[%s413] sm:$0xff]
    %v415 = vld [vmem:[%s413 + $0x8] sm:$0xff]
    %v417 = vrot.slane %v251, 2
    %419 = vmatprep.subr.mxu0 0.0
    %420 = vmatpush1.xpose.msra.mxu0 %v414
    %421 = vmatprep.subr.mxu0 0.0
    %422 = vmatpush1.xpose.msra.mxu0 %v415
    %423 = vmatprep.subr.mxu0 0.0
    %424 = vmatpush1.xpose.msra.mxu0 0.0
    %425 = vmatprep.subr.mxu0 0.0
    %426 = vmatpush1.xpose.msra.mxu0 0.0
    %427 = vmatprep.subr.mxu0 0.0
    %428 = vmatpush1.xpose.msra.mxu0 0.0
    %429 = vmatprep.subr.mxu0 0.0
    %430 = vmatpush1.xpose.msra.mxu0 0.0
    %431 = vmatprep.subr.mxu0 0.0
    %432 = vmatpush1.xpose.msra.mxu0 0.0
    %433 = vmatprep.subr.mxu0 0.0
    %434 = vmatpush1.xpose.msra.mxu0 0.0
    %435 = vmatprep.subr.mxu0 0.0
    %436 = vmatpush1.xpose.msra.mxu0 0.0
    %437 = vmatprep.subr.mxu0 0.0
    %438 = vmatpush1.xpose.msra.mxu0 0.0
    %439 = vmatprep.subr.mxu0 0.0
    %440 = vmatpush1.xpose.msra.mxu0 0.0
    %441 = vmatprep.subr.mxu0 0.0
    %442 = vmatpush1.xpose.msra.mxu0 0.0
    %443 = vmatprep.subr.mxu0 0.0
    %444 = vmatpush1.xpose.msra.mxu0 0.0
    %445 = vmatprep.subr.mxu0 0.0
    %446 = vmatpush1.xpose.msra.mxu0 0.0
    %447 = vmatprep.subr.mxu0 0.0
    %448 = vmatpush1.xpose.msra.mxu0 0.0
    %449 = vmatprep.subr.mxu0 0.0
    %450 = vmatpush1.xpose.msra.mxu0 0.0
    %451 = vmatprep.subr.mxu0 0.0
    %452 = vmatpush1.xpose.msra.mxu0 0.0
    %453 = vmatprep.subr.mxu0 0.0
    %454 = vmatpush1.xpose.msra.mxu0 0.0
    %455 = vmatprep.subr.mxu0 0.0
    %456 = vmatpush1.xpose.msra.mxu0 0.0
    %457 = vmatprep.subr.mxu0 0.0
    %458 = vmatpush1.xpose.msra.mxu0 0.0
    %459 = vmatprep.subr.mxu0 0.0
    %460 = vmatpush1.xpose.msra.mxu0 0.0
    %461 = vmatprep.subr.mxu0 0.0
    %462 = vmatpush1.xpose.msra.mxu0 0.0
    %463 = vmatprep.subr.mxu0 0.0
    %464 = vmatpush1.xpose.msra.mxu0 0.0
    %465 = vmatprep.subr.mxu0 0.0
    %466 = vmatpush1.xpose.msra.mxu0 0.0
    %467 = vmatprep.subr.mxu0 0.0
    %468 = vmatpush1.xpose.msra.mxu0 0.0
    %469 = vmatprep.subr.mxu0 0.0
    %470 = vmatpush1.xpose.msra.mxu0 0.0
    %471 = vmatprep.subr.mxu0 0.0
    %472 = vmatpush1.xpose.msra.mxu0 0.0
    %473 = vmatprep.subr.mxu0 0.0
    %474 = vmatpush1.xpose.msra.mxu0 0.0
    %475 = vmatprep.subr.mxu0 0.0
    %476 = vmatpush1.xpose.msra.mxu0 0.0
    %477 = vmatprep.subr.mxu0 0.0
    %478 = vmatpush1.xpose.msra.mxu0 0.0
    %479 = vmatprep.subr.mxu0 0.0
    %480 = vmatpush1.xpose.msra.mxu0 0.0
    %481 = vmatprep.subr.mxu0 0.0
    %482 = vmatpush1.xpose.msra.mxu0 0.0
    %483 = vmatprep.mubr.f32.mxu0 0.0
    %484 = vmatmul.mubr.f32.gmra.mrb[0].mxu0 %v417
    %v485 = vpop.f32.mrb[0].mxu0
    %v486 = vadd.f32 0.0, %v485
    %v487 = vpop.f32.mrb[0].mxu0
    %488 = vdwg.mxu0
    %v489 = vsel %vm326, %v486, -inf
    %490 = vmax.xlane.f32.xlu0 %v489
    %v491 = vpop.xlane.xlu0 %490
    %v492 = vsub.f32 %v486, %v491
    %v493 = vmul.f32 %v492, 1.442695
    %v494 = vpow.pop %v493
    %v495 = vsel %vm326, %v494, 0.0
    %496 = vadd.xlane.f32.xlu0 %v495
    %v497 = vpop.xlane.xlu0 %496
    %v498 = vrcp.pop %v497
    %v499 = vmul.f32 %v494, %v498
    %v501 = vsel %vm338, %v499, 0
    %503 = vmatprep.subr.mxu0 0.0
    %504 = vmatpush1.msra.mxu0 %v414
    %505 = vmatprep.subr.mxu0 0.0
    %506 = vmatpush1.msra.mxu0 %v415
    %507 = vmatprep.subr.mxu0 0.0
    %508 = vmatpush1.msra.mxu0 0.0
    %509 = vmatprep.subr.mxu0 0.0
    %510 = vmatpush1.msra.mxu0 0.0
    %511 = vmatprep.subr.mxu0 0.0
    %512 = vmatpush1.msra.mxu0 0.0
    %513 = vmatprep.subr.mxu0 0.0
    %514 = vmatpush1.msra.mxu0 0.0
    %515 = vmatprep.subr.mxu0 0.0
    %516 = vmatpush1.msra.mxu0 0.0
    %517 = vmatprep.subr.mxu0 0.0
    %518 = vmatpush1.msra.mxu0 0.0
    %519 = vmatprep.subr.mxu0 0.0
    %520 = vmatpush1.msra.mxu0 0.0
    %521 = vmatprep.subr.mxu0 0.0
    %522 = vmatpush1.msra.mxu0 0.0
    %523 = vmatprep.subr.mxu0 0.0
    %524 = vmatpush1.msra.mxu0 0.0
    %525 = vmatprep.subr.mxu0 0.0
    %526 = vmatpush1.msra.mxu0 0.0
    %527 = vmatprep.subr.mxu0 0.0
    %528 = vmatpush1.msra.mxu0 0.0
    %529 = vmatprep.subr.mxu0 0.0
    %530 = vmatpush1.msra.mxu0 0.0
    %531 = vmatprep.subr.mxu0 0.0
    %532 = vmatpush1.msra.mxu0 0.0
    %533 = vmatprep.subr.mxu0 0.0
    %534 = vmatpush1.msra.mxu0 0.0
    %535 = vmatprep.subr.mxu0 0.0
    %536 = vmatpush1.msra.mxu0 0.0
    %537 = vmatprep.subr.mxu0 0.0
    %538 = vmatpush1.msra.mxu0 0.0
    %539 = vmatprep.subr.mxu0 0.0
    %540 = vmatpush1.msra.mxu0 0.0
    %541 = vmatprep.subr.mxu0 0.0
    %542 = vmatpush1.msra.mxu0 0.0
    %543 = vmatprep.subr.mxu0 0.0
    %544 = vmatpush1.msra.mxu0 0.0
    %545 = vmatprep.subr.mxu0 0.0
    %546 = vmatpush1.msra.mxu0 0.0
    %547 = vmatprep.subr.mxu0 0.0
    %548 = vmatpush1.msra.mxu0 0.0
    %549 = vmatprep.subr.mxu0 0.0
    %550 = vmatpush1.msra.mxu0 0.0
    %551 = vmatprep.subr.mxu0 0.0
    %552 = vmatpush1.msra.mxu0 0.0
    %553 = vmatprep.subr.mxu0 0.0
    %554 = vmatpush1.msra.mxu0 0.0
    %555 = vmatprep.subr.mxu0 0.0
    %556 = vmatpush1.msra.mxu0 0.0
    %557 = vmatprep.subr.mxu0 0.0
    %558 = vmatpush1.msra.mxu0 0.0
    %559 = vmatprep.subr.mxu0 0.0
    %560 = vmatpush1.msra.mxu0 0.0
    %561 = vmatprep.subr.mxu0 0.0
    %562 = vmatpush1.msra.mxu0 0.0
    %563 = vmatprep.subr.mxu0 0.0
    %564 = vmatpush1.msra.mxu0 0.0
    %565 = vmatprep.subr.mxu0 0.0
    %566 = vmatpush1.msra.mxu0 0.0
    %567 = vmatprep.mubr.f32.mxu0 0.0
    %568 = vmatmul.mubr.f32.gmra.mrb[0].mxu0 %v501
    %v569 = vpop.f32.mrb[0].mxu0
    %v570 = vadd.f32 0.0, %v569
    %v571 = vpop.f32.mrb[0].mxu0
    %572 = vdwg.mxu0
    %s573 = scalar_lea.vmem [#allocation10], 2
    %574 = vst [vmem:[%s573] sm:$0x3] %v570
    // Predicated region
    $region38: #{tpu_custom_call.1} parent=1 // pred_check
      _
    $region39: #{tpu_custom_call.1} parent=1 // pred_check_branch
      %576 = sbr.rel (0) target = $region41
    $region40: #{tpu_custom_call.1} parent=1 // pred_region
      %s578 = ssub.s32 64, 64
      %579 = vsyncadd [#allocation4], %s578
      %s580 = sshll.u32 [#allocation10], 4
      %s581 = int_to_ptr.vmem [resolvable:$true] %s580
      %586 = dma.vmem_to_hbm [thread:$0]  %s581, 64, %s5, [#allocation4], 32, 32, 2
    $region41: #{tpu_custom_call.1} parent=1 // pred_fallthru
      _
    // Predicated region
    $region42: #{tpu_custom_call.1} parent=1 // pred_check
      _
    $region43: #{tpu_custom_call.1} parent=1 // pred_check_branch
      %588 = sbr.rel (0) target = $region45
    $region44: #{tpu_custom_call.1} parent=1 // pred_region
      %589 = dma.done [#allocation4], 64
    $region45: #{tpu_custom_call.1} parent=1 // pred_fallthru
      _
    %590 = vsyncpa [#allocation3], 1
    %591 = vsyncpa [#allocation6], 1
    %592 = vsyncpa [#allocation9], 1
    %593 = vsyncpa [#allocation4], 1

</llo_original>
